<compile_context>
chip_gen: v7x
topology: tpu7x:2x2x1
jax: 0.10.0
libtpu: 0.0.40
codegen_flags: <defaults>
</compile_context>

<pallas_src>
import functools
import numpy as np
import jax
import jax.numpy as jnp
from jax.experimental import pallas as pl
from jax.experimental.pallas import tpu as pltpu


# ----------------------------------------------------------------------------
# Kernel body: full-tile VMEM read + write (elementwise identity).
# ----------------------------------------------------------------------------
def _identity_kernel(x_ref, o_ref):
    o_ref[...] = x_ref[...]


# ----------------------------------------------------------------------------
# Sizing heuristics.
# ----------------------------------------------------------------------------
_TILE_BYTES = 2 * 1024 * 1024  # per-block budget for the tiled path (2 MiB):
                               # in+out double-buffered = 8 MiB, safe on v5e's
                               # 16 MiB scoped default and v7x's 2-TC split.


@functools.lru_cache(maxsize=1)
def _whole_array_threshold_bytes() -> int:
    """Largest input that goes through as one gridless VMEM block."""
    try:
        info = pltpu.get_tpu_info()
        vmem = int(getattr(info, "vmem_capacity_bytes", 64 * 1024 * 1024))
    except Exception:  # no TPU visible / API drift — stay conservative
        vmem = 64 * 1024 * 1024
    # input block + output block both live in VMEM; keep well under the
    # scoped limit (v5e/v6e: 128 MiB physical, v7x: 64 MiB per TC).
    return max(4 * 1024 * 1024, min(12 * 1024 * 1024, vmem // 8))


# ----------------------------------------------------------------------------
# Whole-array path: gridless, single VMEM block.
# ----------------------------------------------------------------------------
def _identity_whole(x: jax.Array, alias: bool) -> jax.Array:
    x_bytes = int(x.size) * int(x.dtype.itemsize)
    # Raise the scoped-VMEM limit only if the in+out blocks need it.
    limit = 2 * x_bytes + (2 << 20)
    compiler_params = (
        pltpu.CompilerParams(vmem_limit_bytes=int(limit))
        if limit > (16 << 20) else None
    )
    kwargs = {"input_output_aliases": {0: 0}} if alias else {}
    return pl.pallas_call(
        _identity_kernel,
        out_shape=jax.ShapeDtypeStruct(x.shape, x.dtype),
        in_specs=[pl.BlockSpec(memory_space=pltpu.MemorySpace.VMEM)],
        out_specs=pl.BlockSpec(memory_space=pltpu.MemorySpace.VMEM),
        compiler_params=compiler_params,
        **kwargs,
    )(x)


# ----------------------------------------------------------------------------
# Tiled path: tile the original array over axis 0, trailing dims full.
# No jnp.pad, no trailing slice — bytes moved = exactly 1 read + 1 write.
# ----------------------------------------------------------------------------
def _identity_tiled(x: jax.Array, alias: bool) -> jax.Array:
    orig_shape = x.shape

    if x.ndim == 1:
        if x.shape[0] % 512 == 0:
            # Free (bitcast) reshape under jit to a lane-dense 2-D view.
            x2 = x.reshape(-1, 512)
        else:
            # TODO(synk): ragged 1-D inputs larger than the whole-array
            # threshold fall back to a single block (rare for this module).
            return _identity_whole(x, alias)
    else:
        x2 = x

    d0 = x2.shape[0]
    row_elems = int(np.prod(x2.shape[1:])) if x2.ndim > 1 else 1
    row_bytes = row_elems * int(x2.dtype.itemsize)
    tile0 = max(1, min(d0, _TILE_BYTES // max(row_bytes, 1)))

    if x2.ndim == 2:
        # Second-to-last block dim must be a multiple of 8 (or the full dim).
        tile0 = (tile0 // 8) * 8
        if tile0 == 0:
            # Rows wider than the tile budget: single-block fallback.
            return _identity_whole(x, alias)

    block_shape = (tile0,) + x2.shape[1:]
    nd = x2.ndim
    index_map = lambda i: (i,) + (0,) * (nd - 1)
    kwargs = {"input_output_aliases": {0: 0}} if alias else {}

    out = pl.pallas_call(
        _identity_kernel,
        out_shape=jax.ShapeDtypeStruct(x2.shape, x2.dtype),
        grid=(pl.cdiv(d0, tile0),),
        in_specs=[pl.BlockSpec(block_shape, index_map)],
        out_specs=pl.BlockSpec(block_shape, index_map),
        compiler_params=pltpu.CompilerParams(
            # Pure HBM-bound copy: let v7x's two TensorCores split the rows;
            # measured no-op on single-TC v5e/v6e.
            dimension_semantics=("parallel",),
        ),
        **kwargs,
    )(x2)
    return out.reshape(orig_shape)


# ----------------------------------------------------------------------------
# Jitted forwards (shape-static dispatch between the two paths).
# ----------------------------------------------------------------------------
def _dispatch(x: jax.Array, alias: bool) -> jax.Array:
    x_bytes = int(x.size) * int(x.dtype.itemsize)
    if x_bytes <= _whole_array_threshold_bytes():
        return _identity_whole(x, alias)
    return _identity_tiled(x, alias)


@jax.jit
def _forward(x):
    # Safe path: no aliasing — caller keeps ownership of x.
    return _dispatch(x, alias=False)


@functools.partial(jax.jit, donate_argnums=(0,))
def _forward_donated(x):
    # In-place path (P8): output aliases the (donated) input buffer.  The
    # caller must not reuse x after this call.
    return _dispatch(x, alias=True)


class Model3Pallas:
    """JAX/Pallas counterpart of Model_3(hidden_size) — identity forward."""

    def __init__(self, hidden_size: int, donate: bool = False):
        # Reference __init__ defines no parameters; nothing to initialize.
        self.hidden_size = hidden_size
        self.donate = donate

    def __call__(self, x: jax.Array) -> jax.Array:
        if self.donate:
            return _forward_donated(x)
        return _forward(x)


if __name__ == "__main__":
    key = jax.random.PRNGKey(0)
    x = jax.random.normal(key, (2, 4, 16, 16), dtype=jnp.float32)  # NCHW

    model = Model3Pallas(hidden_size=32)  # donate=False: x stays valid

    # Whole-array (gridless) path.
    y = jax.block_until_ready(model(x))
    assert y.shape == x.shape and y.dtype == x.dtype
    assert bool(jnp.array_equal(y, x)), "identity (whole-array path) mismatch"

    # Pad/slice-free tiled path with a ragged leading dim (masked last block).
    xl = jax.random.normal(jax.random.PRNGKey(1), (4099, 1024), dtype=jnp.float32)
    yl = jax.block_until_ready(model(xl))
    assert yl.shape == xl.shape
    assert bool(jnp.array_equal(yl, xl)), "identity (tiled path) mismatch"

    print("KERNEL_OK")
</pallas_src>

<mosaic_0001>
module attributes {stable_mosaic.version = 11 : i64} {
  func.func @_identity_kernel(%arg0: memref<2x4x16x16xf32, #tpu.memory_space<vmem>>, %arg1: memref<2x4x16x16xf32, #tpu.memory_space<vmem>>) attributes {dimension_semantics = [], scalar_prefetch = 0 : i64, scratch_operands = 0 : i64, tpu.core_type = #tpu.core_type<tc>} {
    %c0 = arith.constant 0 : index
    %c0_0 = arith.constant 0 : index
    %c0_1 = arith.constant 0 : index
    %c0_2 = arith.constant 0 : index
    %0 = vector.load %arg0[%c0, %c0_0, %c0_1, %c0_2] : memref<2x4x16x16xf32, #tpu.memory_space<vmem>>, vector<2x4x16x16xf32>
    %c0_3 = arith.constant 0 : index
    %c0_4 = arith.constant 0 : index
    %c0_5 = arith.constant 0 : index
    %c0_6 = arith.constant 0 : index
    %1 = vector.load %arg1[%c0_3, %c0_4, %c0_5, %c0_6] : memref<2x4x16x16xf32, #tpu.memory_space<vmem>>, vector<2x4x16x16xf32>
    tpu.vector_store %arg1[%c0_3, %c0_4, %c0_5, %c0_6], %0 {strides = array<i32>} : memref<2x4x16x16xf32, #tpu.memory_space<vmem>>, vector<2x4x16x16xf32>,
    return
  }
}

</mosaic_0001>

<llo_original>
// kernel: _forward.1
$region0: #{_forward.1}
  #allocation0 [shape = 'u32[]', space=smem, size = 0x4, offset = 0x4, fixed_abs, tag = 'smem constant byte address 0x4 - core index']
  #allocation1 [shape = 'u32[144,128]{1,0:T(1,128)}', space=vmem, size = 0x12000, scoped, tag = 'internal scratch']
  %s0 = inlined_call_operand.hbm [shape: f32[2,4,16,16], index: 0, kind: input, shape index: {}]
  %s1 = inlined_call_operand.hbm [shape: f32[2,4,16,16], index: 1, kind: output, shape index: {}]
  %s2 = sld [smem:[#allocation0]]
  $region18: #{_forward.1} parent=0
    _
  %s4 = ssub.s32 1, %s2
  %s5 = scalar_select 0, %s4, %s2
  $region1: #{_forward.1} parent=0
    #allocation2 [shape = 'u8[65536]{0}', space=vmem, size = 0x10000, scoped, tag = 'input window, operand 0, single buffered']
    #allocation3 [shape = 's32[1]{0}', space=sflag, size = 0x4, scoped, tag = 'scoped memory for _forward.1']
    #allocation4 [shape = 's32[1]{0}', space=sflag, size = 0x4, scoped, tag = 'scoped memory for _forward.1']
    #allocation5 [shape = 'u8[65536]{0}', space=vmem, size = 0x10000, scoped, tag = 'output window, operand 0, single buffered']
    %6 = vsyncpa [#allocation3], 0
    %7 = vsyncpa [#allocation4], 0
    // Predicated region
    $region2: #{_forward.1} parent=1 // pred_check
      _
    $region3: #{_forward.1} parent=1 // pred_check_branch
      %9 = sbr.rel (0) target = $region5
    $region4: #{_forward.1} parent=1 // pred_region
      %s11 = ssub.s32 2048, 2048
      %12 = vsyncadd [#allocation3], %s11
      %s13 = sshll.u32 [#allocation2], 4
      %s14 = int_to_ptr.vmem [resolvable:$true] %s13
      %19 = dma.hbm_to_vmem [thread:$0]  %s0, 2048, %s14, [#allocation3], 128, 128, 8
    $region5: #{_forward.1} parent=1 // pred_fallthru
      _
    // Predicated region
    $region6: #{_forward.1} parent=1 // pred_check
      _
    $region7: #{_forward.1} parent=1 // pred_check_branch
      %21 = sbr.rel (0) target = $region9
    $region8: #{_forward.1} parent=1 // pred_region
      %22 = dma.done [#allocation3], 2048
    $region9: #{_forward.1} parent=1 // pred_fallthru
      _
    %v23 = vld [vmem:[#allocation2] sm:$0xff]
    %v24 = vld [vmem:[#allocation2 + $0x8] sm:$0xff]
    %v25 = vld [vmem:[#allocation2 + $0x10] sm:$0xff]
    %v26 = vld [vmem:[#allocation2 + $0x18] sm:$0xff]
    %v27 = vld [vmem:[#allocation2 + $0x20] sm:$0xff]
    %v28 = vld [vmem:[#allocation2 + $0x28] sm:$0xff]
    %v29 = vld [vmem:[#allocation2 + $0x30] sm:$0xff]
    %v30 = vld [vmem:[#allocation2 + $0x38] sm:$0xff]
    %v31 = vld [vmem:[#allocation2 + $0x40] sm:$0xff]
    %v32 = vld [vmem:[#allocation2 + $0x48] sm:$0xff]
    %v33 = vld [vmem:[#allocation2 + $0x50] sm:$0xff]
    %v34 = vld [vmem:[#allocation2 + $0x58] sm:$0xff]
    %v35 = vld [vmem:[#allocation2 + $0x60] sm:$0xff]
    %v36 = vld [vmem:[#allocation2 + $0x68] sm:$0xff]
    %v37 = vld [vmem:[#allocation2 + $0x70] sm:$0xff]
    %v38 = vld [vmem:[#allocation2 + $0x78] sm:$0xff]
    %vm39 = vcmask 130048
    %40 = vst.msk [vmem:[#allocation5] sm:$0xff] %vm39, %v23
    %41 = vst.msk [vmem:[#allocation5 + $0x8] sm:$0xff] %vm39, %v24
    %42 = vst.msk [vmem:[#allocation5 + $0x10] sm:$0xff] %vm39, %v25
    %43 = vst.msk [vmem:[#allocation5 + $0x18] sm:$0xff] %vm39, %v26
    %44 = vst.msk [vmem:[#allocation5 + $0x20] sm:$0xff] %vm39, %v27
    %45 = vst.msk [vmem:[#allocation5 + $0x28] sm:$0xff] %vm39, %v28
    %46 = vst.msk [vmem:[#allocation5 + $0x30] sm:$0xff] %vm39, %v29
    %47 = vst.msk [vmem:[#allocation5 + $0x38] sm:$0xff] %vm39, %v30
    %48 = vst.msk [vmem:[#allocation5 + $0x40] sm:$0xff] %vm39, %v31
    %49 = vst.msk [vmem:[#allocation5 + $0x48] sm:$0xff] %vm39, %v32
    %50 = vst.msk [vmem:[#allocation5 + $0x50] sm:$0xff] %vm39, %v33
    %51 = vst.msk [vmem:[#allocation5 + $0x58] sm:$0xff] %vm39, %v34
    %52 = vst.msk [vmem:[#allocation5 + $0x60] sm:$0xff] %vm39, %v35
    %53 = vst.msk [vmem:[#allocation5 + $0x68] sm:$0xff] %vm39, %v36
    %54 = vst.msk [vmem:[#allocation5 + $0x70] sm:$0xff] %vm39, %v37
    %55 = vst.msk [vmem:[#allocation5 + $0x78] sm:$0xff] %vm39, %v38
    // Predicated region
    $region10: #{_forward.1} parent=1 // pred_check
      _
    $region11: #{_forward.1} parent=1 // pred_check_branch
      %57 = sbr.rel (0) target = $region13
    $region12: #{_forward.1} parent=1 // pred_region
      %s59 = ssub.s32 2048, 2048
      %60 = vsyncadd [#allocation4], %s59
      %s61 = sshll.u32 [#allocation5], 4
      %s62 = int_to_ptr.vmem [resolvable:$true] %s61
      %67 = dma.vmem_to_hbm [thread:$0]  %s62, 2048, %s1, [#allocation4], 128, 128, 8
    $region13: #{_forward.1} parent=1 // pred_fallthru
      _
    // Predicated region
    $region14: #{_forward.1} parent=1 // pred_check
      _
    $region15: #{_forward.1} parent=1 // pred_check_branch
      %69 = sbr.rel (0) target = $region17
    $region16: #{_forward.1} parent=1 // pred_region
      %70 = dma.done [#allocation4], 2048
    $region17: #{_forward.1} parent=1 // pred_fallthru
      _
    %71 = vsyncpa [#allocation3], 1
    %72 = vsyncpa [#allocation4], 1

</llo_original>
